<compile_context>
chip_gen: v6e
topology: v6e:2x2x1
jax: 0.10.0
libtpu: 0.0.40
codegen_flags: <defaults>
</compile_context>

<pallas_src>
import math
from functools import partial

import jax
import jax.numpy as jnp
import numpy as np
from jax.experimental import pallas as pl
from jax.experimental.pallas import tpu as pltpu


def _dhsnn_seq_kernel(x_ref, w_ref, b_ref, beta_ref, alpha_ref,
                      mem0_ref, spk0_ref, d0_ref, vth_ref,
                      mem_out, spk_out, d_out,
                      mem_sc, spk_sc, *, branch, out_dim):
    """One (batch-block, timestep) grid point of the fused DH-SNN recurrence.

    x_ref     : (1, Bt, Din)      bf16  input spikes of this timestep
    w_ref     : (Din, Br*O)       bf16  dense weight, branch-major columns (resident)
    b_ref     : (1, Br*O)         f32   dense bias, branch-major (resident)
    beta_ref  : (1, Br*O)         f32   sigmoid(tau_n), branch-major (resident)
    alpha_ref : (1, O)            f32   sigmoid(tau_m) (resident)
    mem0/spk0 : (Bt, O)           f32   initial somatic state
    d0_ref    : (Bt, Br*O)        f32   initial dendritic state (lane-dense)
    vth_ref   : (Bt, O)           f32   thresholds
    mem_out/spk_out : (1, Bt, O)  f32   per-step outputs (streamed)
    d_out     : (Bt, Br*O)        f32   VMEM-resident dendritic state / final output
    mem_sc/spk_sc   : (Bt, O)     f32   VMEM scratch carrying state across t
    """
    t = pl.program_id(1)

    @pl.when(t == 0)
    def _init():
        mem_sc[...] = mem0_ref[...]
        spk_sc[...] = spk0_ref[...]
        d_out[...] = d0_ref[...]

    # dense(k_input): bf16 MXU matmul, f32 accumulation; bias add in f32.
    y = jnp.dot(x_ref[0], w_ref[...],
                preferred_element_type=jnp.float32) + b_ref[...]     # (Bt, Br*O)

    # Dendritic low-pass filter, lane-dense (no 3-D reshape / relayout).
    beta = beta_ref[...]
    d_new = beta * d_out[...] + (1.0 - beta) * y
    d_out[...] = d_new

    # Branch sum -> somatic input: static lane slices, unrolled (branch is small).
    l_input = d_new[:, 0:out_dim]
    for br in range(1, branch):
        l_input = l_input + d_new[:, br * out_dim:(br + 1) * out_dim]   # (Bt, O)

    # mem_update_pra (R_m = 1, dt unused in the forward pass).
    alpha = alpha_ref[...]
    mem_new = mem_sc[...] * alpha * (1.0 - spk_sc[...]) + (1.0 - alpha) * l_input
    spk_new = (mem_new - vth_ref[...] > 0.0).astype(jnp.float32)
    mem_sc[...] = mem_new
    spk_sc[...] = spk_new

    mem_out[0] = mem_new
    spk_out[0] = spk_new


def _round_up(x, m):
    return (x + m - 1) // m * m


@partial(jax.jit, static_argnames=("pad",))
def dhsnn_forward_seq(x_seq, W, b, tau_m, tau_n, d_input, mem, spike, v_th, *, pad):
    """Runs the DH-SNN dense layer over a whole spike sequence in one
    pallas_call.  Inputs/outputs use the PyTorch layout; all layout plumbing
    happens once here (outside the per-timestep hot path).

    x_seq : (T, B, input_dim) input spikes
    W     : (output_dim*branch, input_dim+pad)   nn.Linear weight
    b     : (output_dim*branch,)                 nn.Linear bias
    Returns (mem_seq, spk_seq, d_final):
      mem_seq, spk_seq : (T, B, output_dim)
      d_final          : (B, output_dim, branch)
    """
    T, B, input_dim = x_seq.shape
    O, Br = tau_n.shape
    Din = input_dim + pad
    BrO = Br * O

    # ---- batch padding to full 8-row sublane tiles --------------------------
    Bp = _round_up(max(B, 1), 8)
    Bt = 8                       # batch tile = one sublane tile per grid block
    n_bblk = Bp // Bt

    def pad_batch(a, value=0.0):
        return jnp.pad(a, ((0, Bp - B),) + ((0, 0),) * (a.ndim - 1),
                       constant_values=value)

    # ---- one-time layout plumbing (constants across timesteps) --------------
    # dense outputs become branch-major so output_dim stays lane-contiguous:
    #   column c = br*O + o   <->   PyTorch dense row o*Br + br
    w_bm = W.reshape(O, Br, Din).transpose(1, 0, 2).reshape(BrO, Din)
    w_t = w_bm.T.astype(jnp.bfloat16)                                 # (Din, BrO)
    b_bm = b.reshape(O, Br).T.reshape(1, BrO).astype(jnp.float32)
    beta_bm = jax.nn.sigmoid(tau_n).T.reshape(1, BrO).astype(jnp.float32)
    alpha_2d = jax.nn.sigmoid(tau_m).reshape(1, O).astype(jnp.float32)

    # input spikes: feature-pad, batch-pad, bf16 (0/1 is exact in bf16)
    x_p = jnp.pad(x_seq.astype(jnp.float32),
                  ((0, 0), (0, Bp - B), (0, pad))).astype(jnp.bfloat16)

    mem_p = pad_batch(mem.astype(jnp.float32))
    spk_p = pad_batch(spike.astype(jnp.float32))
    vth_p = pad_batch(v_th.astype(jnp.float32), value=1.0)
    d_p = pad_batch(d_input.astype(jnp.float32)).transpose(0, 2, 1).reshape(Bp, BrO)

    kernel = partial(_dhsnn_seq_kernel, branch=Br, out_dim=O)

    resident = lambda bi, t: (0, 0)          # stays in VMEM across the grid
    per_batch = lambda bi, t: (bi, 0)        # per batch block, constant over t
    per_step = lambda bi, t: (t, bi, 0)      # streamed per timestep

    in_specs = [
        pl.BlockSpec((1, Bt, Din), per_step),     # x_t
        pl.BlockSpec((Din, BrO), resident),       # W (bf16, VMEM-resident)
        pl.BlockSpec((1, BrO), resident),         # bias
        pl.BlockSpec((1, BrO), resident),         # beta = sigmoid(tau_n)
        pl.BlockSpec((1, O), resident),           # alpha = sigmoid(tau_m)
        pl.BlockSpec((Bt, O), per_batch),         # mem0
        pl.BlockSpec((Bt, O), per_batch),         # spike0
        pl.BlockSpec((Bt, BrO), per_batch),       # d0 (branch-major, lane-dense)
        pl.BlockSpec((Bt, O), per_batch),         # v_th
    ]
    out_specs = (
        pl.BlockSpec((1, Bt, O), per_step),       # mem per step
        pl.BlockSpec((1, Bt, O), per_step),       # spike per step
        pl.BlockSpec((Bt, BrO), per_batch),       # final dendritic state
    )
    out_shapes = (
        jax.ShapeDtypeStruct((T, Bp, O), jnp.float32),
        jax.ShapeDtypeStruct((T, Bp, O), jnp.float32),
        jax.ShapeDtypeStruct((Bp, BrO), jnp.float32),
    )

    mem_seq, spk_seq, d_fin = pl.pallas_call(
        kernel,
        grid=(n_bblk, T),
        in_specs=in_specs,
        out_specs=out_specs,
        out_shape=out_shapes,
        scratch_shapes=[pltpu.VMEM((Bt, O), jnp.float32),     # mem carry
                        pltpu.VMEM((Bt, O), jnp.float32)],    # spike carry
        input_output_aliases={7: 2},     # d0 -> d_final (in-place state update)
        compiler_params=pltpu.CompilerParams(
            dimension_semantics=("parallel", "arbitrary"),
            vmem_limit_bytes=32 * 1024 * 1024),
    )(x_p, w_t, b_bm, beta_bm, alpha_2d, mem_p, spk_p, d_p, vth_p)

    # ---- back to PyTorch layouts --------------------------------------------
    mem_seq = mem_seq[:, :B]
    spk_seq = spk_seq[:, :B]
    d_final = d_fin[:B].reshape(B, Br, O).transpose(0, 2, 1)
    return mem_seq, spk_seq, d_final


def reference_forward_seq(x_seq, W, b, tau_m, tau_n, d_input, mem, spike, v_th, pad):
    """Pure-JAX reference mirroring the PyTorch per-timestep forward, looped
    over the sequence.  Uses the same bf16-input / f32-accumulate matmul as the
    kernel so the comparison is apples-to-apples."""
    T, B, _ = x_seq.shape
    O, Br = tau_n.shape
    beta = jax.nn.sigmoid(tau_n)                 # (O, Br)
    alpha = jax.nn.sigmoid(tau_m)                # (O,)
    W_bf = W.astype(jnp.bfloat16)
    d, m, s = d_input, mem, spike
    mems, spks = [], []
    for t in range(T):
        k = jnp.concatenate([x_seq[t].astype(jnp.float32),
                             jnp.zeros((B, pad), jnp.float32)], axis=1)
        dense = jnp.dot(k.astype(jnp.bfloat16), W_bf.T,
                        preferred_element_type=jnp.float32) + b
        d = beta * d + (1.0 - beta) * dense.reshape(B, O, Br)
        l = d.sum(axis=2)
        m = m * alpha * (1.0 - s) + (1.0 - alpha) * l
        s = (m - v_th > 0.0).astype(jnp.float32)
        mems.append(m)
        spks.append(s)
    return jnp.stack(mems), jnp.stack(spks), d


if __name__ == "__main__":
    key = jax.random.PRNGKey(0)
    B, T, input_dim, output_dim, branch = 2, 8, 30, 32, 4
    vth, low_m, high_m, low_n, high_n = 0.5, 0.0, 4.0, 0.0, 4.0

    pad = (input_dim // branch * branch + branch - input_dim) % branch
    Din = input_dim + pad

    # deterministic parameter init (shapes from __init__)
    k_w, k_b, k_tm, k_tn, k_x, k_mem, k_spk = jax.random.split(key, 7)
    bound = 1.0 / math.sqrt(Din)                     # nn.Linear default init
    W = jax.random.uniform(k_w, (output_dim * branch, Din), jnp.float32, -bound, bound)
    bias = jax.random.uniform(k_b, (output_dim * branch,), jnp.float32, -bound, bound)
    tau_m = jax.random.uniform(k_tm, (output_dim,), jnp.float32, low_m, high_m)
    tau_n = jax.random.uniform(k_tn, (output_dim, branch), jnp.float32, low_n, high_n)
    # TODO(synk): create_mask/apply_mask are never called inside forward(); to
    # emulate apply_mask, pre-multiply W by the branch connectivity mask.

    # state from set_neuron_state(batch_size)
    mem0 = jax.random.uniform(k_mem, (B, output_dim), jnp.float32)
    spk0 = jax.random.uniform(k_spk, (B, output_dim), jnp.float32)
    d0 = jnp.zeros((B, output_dim, branch), jnp.float32)
    v_th = jnp.ones((B, output_dim), jnp.float32) * vth

    # example input spike sequence (T timesteps)
    x_seq = (jax.random.uniform(k_x, (T, B, input_dim), jnp.float32) > 0.5
             ).astype(jnp.float32)

    mem_seq, spk_seq, d_fin = dhsnn_forward_seq(
        x_seq, W, bias, tau_m, tau_n, d0, mem0, spk0, v_th, pad=pad)
    jax.block_until_ready((mem_seq, spk_seq, d_fin))

    mem_ref, spk_ref, d_ref = reference_forward_seq(
        x_seq, W, bias, tau_m, tau_n, d0, mem0, spk0, v_th, pad)

    np.testing.assert_allclose(np.asarray(mem_seq), np.asarray(mem_ref),
                               rtol=1e-5, atol=1e-5)
    np.testing.assert_allclose(np.asarray(spk_seq), np.asarray(spk_ref),
                               rtol=1e-5, atol=1e-5)
    np.testing.assert_allclose(np.asarray(d_fin), np.asarray(d_ref),
                               rtol=1e-5, atol=1e-5)
    print("KERNEL_OK")
</pallas_src>

<mosaic_0001>
module attributes {stable_mosaic.version = 11 : i64} {
  func.func @_dhsnn_seq_kernel(%arg0: i32, %arg1: i32, %arg2: memref<1x8x32xbf16, #tpu.memory_space<vmem>>, %arg3: memref<32x128xbf16, #tpu.memory_space<vmem>>, %arg4: memref<1x128xf32, #tpu.memory_space<vmem>>, %arg5: memref<1x128xf32, #tpu.memory_space<vmem>>, %arg6: memref<1x32xf32, #tpu.memory_space<vmem>>, %arg7: memref<8x32xf32, #tpu.memory_space<vmem>>, %arg8: memref<8x32xf32, #tpu.memory_space<vmem>>, %arg9: memref<8x128xf32, #tpu.memory_space<vmem>>, %arg10: memref<8x32xf32, #tpu.memory_space<vmem>>, %arg11: memref<1x8x32xf32, #tpu.memory_space<vmem>>, %arg12: memref<1x8x32xf32, #tpu.memory_space<vmem>>, %arg13: memref<8x128xf32, #tpu.memory_space<vmem>>, %arg14: memref<8x32xf32, #tpu.memory_space<vmem>>, %arg15: memref<8x32xf32, #tpu.memory_space<vmem>>) attributes {dimension_semantics = [#tpu.dimension_semantics<parallel>, #tpu.dimension_semantics<arbitrary>], iteration_bounds = array<i64: 1, 8>, scalar_prefetch = 0 : i64, scratch_operands = 2 : i64, tpu.core_type = #tpu.core_type<tc>, window_params = [{transform_indices = @transform_0, window_bounds = array<i64: 1, 8, 32>}, {pipeline_mode = #tpu.pipeline_mode<synchronous>, transform_indices = @transform_1, window_bounds = array<i64: 32, 128>}, {pipeline_mode = #tpu.pipeline_mode<synchronous>, transform_indices = @transform_2, window_bounds = array<i64: 1, 128>}, {pipeline_mode = #tpu.pipeline_mode<synchronous>, transform_indices = @transform_3, window_bounds = array<i64: 1, 128>}, {pipeline_mode = #tpu.pipeline_mode<synchronous>, transform_indices = @transform_4, window_bounds = array<i64: 1, 32>}, {transform_indices = @transform_5, window_bounds = array<i64: 8, 32>}, {transform_indices = @transform_6, window_bounds = array<i64: 8, 32>}, {transform_indices = @transform_7, window_bounds = array<i64: 8, 128>}, {transform_indices = @transform_8, window_bounds = array<i64: 8, 32>}, {transform_indices = @transform_9, window_bounds = array<i64: 1, 8, 32>}, {transform_indices = @transform_10, window_bounds = array<i64: 1, 8, 32>}, {transform_indices = @transform_11, window_bounds = array<i64: 8, 128>}]} {
    %c0_i32 = arith.constant 0 : i32
    %0 = arith.cmpi eq, %arg1, %c0_i32 : i32
    %1 = arith.extui %0 : i1 to i32
    %c0_i32_0 = arith.constant 0 : i32
    %2 = arith.cmpi ne, %1, %c0_i32_0 : i32
    scf.if %2 {
      %c0_35 = arith.constant 0 : index
      %c0_36 = arith.constant 0 : index
      %54 = vector.load %arg7[%c0_35, %c0_36] : memref<8x32xf32, #tpu.memory_space<vmem>>, vector<8x32xf32>
      %c0_37 = arith.constant 0 : index
      %c0_38 = arith.constant 0 : index
      %55 = vector.load %arg14[%c0_37, %c0_38] : memref<8x32xf32, #tpu.memory_space<vmem>>, vector<8x32xf32>
      tpu.vector_store %arg14[%c0_37, %c0_38], %54 {strides = array<i32>} : memref<8x32xf32, #tpu.memory_space<vmem>>, vector<8x32xf32>,
      %c0_39 = arith.constant 0 : index
      %c0_40 = arith.constant 0 : index
      %56 = vector.load %arg8[%c0_39, %c0_40] : memref<8x32xf32, #tpu.memory_space<vmem>>, vector<8x32xf32>
      %c0_41 = arith.constant 0 : index
      %c0_42 = arith.constant 0 : index
      %57 = vector.load %arg15[%c0_41, %c0_42] : memref<8x32xf32, #tpu.memory_space<vmem>>, vector<8x32xf32>
      tpu.vector_store %arg15[%c0_41, %c0_42], %56 {strides = array<i32>} : memref<8x32xf32, #tpu.memory_space<vmem>>, vector<8x32xf32>,
      %c0_43 = arith.constant 0 : index
      %c0_44 = arith.constant 0 : index
      %58 = vector.load %arg9[%c0_43, %c0_44] : memref<8x128xf32, #tpu.memory_space<vmem>>, vector<8x128xf32>
      %c0_45 = arith.constant 0 : index
      %c0_46 = arith.constant 0 : index
      %59 = vector.load %arg13[%c0_45, %c0_46] : memref<8x128xf32, #tpu.memory_space<vmem>>, vector<8x128xf32>
      tpu.vector_store %arg13[%c0_45, %c0_46], %58 {strides = array<i32>} : memref<8x128xf32, #tpu.memory_space<vmem>>, vector<8x128xf32>,
    } else {
    }
    %c0 = arith.constant 0 : index
    %c0_1 = arith.constant 0 : index
    %c0_2 = arith.constant 0 : index
    %3 = vector.load %arg2[%c0, %c0_1, %c0_2] : memref<1x8x32xbf16, #tpu.memory_space<vmem>>, vector<1x8x32xbf16>
    %4 = vector.shape_cast %3 : vector<1x8x32xbf16> to vector<8x32xbf16>
    %c0_3 = arith.constant 0 : index
    %c0_4 = arith.constant 0 : index
    %5 = vector.load %arg3[%c0_3, %c0_4] : memref<32x128xbf16, #tpu.memory_space<vmem>>, vector<32x128xbf16>
    %cst = arith.constant dense<0.000000e+00> : vector<8x128xf32>
    %6 = tpu.matmul %4, %5, %cst {dimension_numbers = #tpu.dot_dimension_numbers<[1], [0], [0], [1], [0, 0, 1, 1], [], []>} : vector<8x32xbf16>, vector<32x128xbf16>, vector<8x128xf32> -> vector<8x128xf32>
    %c0_5 = arith.constant 0 : index
    %c0_6 = arith.constant 0 : index
    %7 = vector.load %arg4[%c0_5, %c0_6] : memref<1x128xf32, #tpu.memory_space<vmem>>, vector<1x128xf32>
    %8 = vector.broadcast %7 : vector<1x128xf32> to vector<8x128xf32>
    %9 = arith.addf %6, %8 : vector<8x128xf32>
    %c0_7 = arith.constant 0 : index
    %c0_8 = arith.constant 0 : index
    %10 = vector.load %arg5[%c0_7, %c0_8] : memref<1x128xf32, #tpu.memory_space<vmem>>, vector<1x128xf32>
    %c0_9 = arith.constant 0 : index
    %c0_10 = arith.constant 0 : index
    %11 = vector.load %arg13[%c0_9, %c0_10] : memref<8x128xf32, #tpu.memory_space<vmem>>, vector<8x128xf32>
    %12 = vector.broadcast %10 : vector<1x128xf32> to vector<8x128xf32>
    %13 = arith.mulf %12, %11 : vector<8x128xf32>
    %cst_11 = arith.constant 1.000000e+00 : f32
    %14 = vector.broadcast %cst_11 : f32 to vector<1x128xf32>
    %15 = arith.subf %14, %10 : vector<1x128xf32>
    %16 = vector.broadcast %15 : vector<1x128xf32> to vector<8x128xf32>
    %17 = arith.mulf %16, %9 : vector<8x128xf32>
    %18 = arith.addf %13, %17 : vector<8x128xf32>
    %c0_12 = arith.constant 0 : index
    %c0_13 = arith.constant 0 : index
    %19 = vector.load %arg13[%c0_12, %c0_13] : memref<8x128xf32, #tpu.memory_space<vmem>>, vector<8x128xf32>
    tpu.vector_store %arg13[%c0_12, %c0_13], %18 {strides = array<i32>} : memref<8x128xf32, #tpu.memory_space<vmem>>, vector<8x128xf32>,
    %20 = vector.extract_strided_slice %18 {offsets = [0, 0], sizes = [8, 32], strides = [1, 1]} : vector<8x128xf32> to vector<8x32xf32>
    %21 = vector.extract_strided_slice %18 {offsets = [0, 32], sizes = [8, 32], strides = [1, 1]} : vector<8x128xf32> to vector<8x32xf32>
    %22 = arith.addf %20, %21 : vector<8x32xf32>
    %23 = vector.extract_strided_slice %18 {offsets = [0, 64], sizes = [8, 32], strides = [1, 1]} : vector<8x128xf32> to vector<8x32xf32>
    %24 = arith.addf %22, %23 : vector<8x32xf32>
    %25 = vector.extract_strided_slice %18 {offsets = [0, 96], sizes = [8, 32], strides = [1, 1]} : vector<8x128xf32> to vector<8x32xf32>
    %26 = arith.addf %24, %25 : vector<8x32xf32>
    %c0_14 = arith.constant 0 : index
    %c0_15 = arith.constant 0 : index
    %27 = vector.load %arg6[%c0_14, %c0_15] : memref<1x32xf32, #tpu.memory_space<vmem>>, vector<1x32xf32>
    %c0_16 = arith.constant 0 : index
    %c0_17 = arith.constant 0 : index
    %28 = vector.load %arg14[%c0_16, %c0_17] : memref<8x32xf32, #tpu.memory_space<vmem>>, vector<8x32xf32>
    %29 = vector.broadcast %27 : vector<1x32xf32> to vector<8x32xf32>
    %30 = arith.mulf %28, %29 : vector<8x32xf32>
    %c0_18 = arith.constant 0 : index
    %c0_19 = arith.constant 0 : index
    %31 = vector.load %arg15[%c0_18, %c0_19] : memref<8x32xf32, #tpu.memory_space<vmem>>, vector<8x32xf32>
    %cst_20 = arith.constant 1.000000e+00 : f32
    %32 = vector.broadcast %cst_20 : f32 to vector<8x32xf32>
    %33 = arith.subf %32, %31 : vector<8x32xf32>
    %34 = arith.mulf %30, %33 : vector<8x32xf32>
    %cst_21 = arith.constant 1.000000e+00 : f32
    %35 = vector.broadcast %cst_21 : f32 to vector<1x32xf32>
    %36 = arith.subf %35, %27 : vector<1x32xf32>
    %37 = vector.broadcast %36 : vector<1x32xf32> to vector<8x32xf32>
    %38 = arith.mulf %37, %26 : vector<8x32xf32>
    %39 = arith.addf %34, %38 : vector<8x32xf32>
    %c0_22 = arith.constant 0 : index
    %c0_23 = arith.constant 0 : index
    %40 = vector.load %arg10[%c0_22, %c0_23] : memref<8x32xf32, #tpu.memory_space<vmem>>, vector<8x32xf32>
    %41 = arith.subf %39, %40 : vector<8x32xf32>
    %cst_24 = arith.constant 0.000000e+00 : f32
    %42 = vector.broadcast %cst_24 : f32 to vector<8x32xf32>
    %43 = arith.cmpf ogt, %41, %42 : vector<8x32xf32>
    %44 = arith.extui %43 : vector<8x32xi1> to vector<8x32xi32>
    %45 = arith.sitofp %44 : vector<8x32xi32> to vector<8x32xf32>
    %c0_25 = arith.constant 0 : index
    %c0_26 = arith.constant 0 : index
    %46 = vector.load %arg14[%c0_25, %c0_26] : memref<8x32xf32, #tpu.memory_space<vmem>>, vector<8x32xf32>
    tpu.vector_store %arg14[%c0_25, %c0_26], %39 {strides = array<i32>} : memref<8x32xf32, #tpu.memory_space<vmem>>, vector<8x32xf32>,
    %c0_27 = arith.constant 0 : index
    %c0_28 = arith.constant 0 : index
    %47 = vector.load %arg15[%c0_27, %c0_28] : memref<8x32xf32, #tpu.memory_space<vmem>>, vector<8x32xf32>
    tpu.vector_store %arg15[%c0_27, %c0_28], %45 {strides = array<i32>} : memref<8x32xf32, #tpu.memory_space<vmem>>, vector<8x32xf32>,
    %c0_29 = arith.constant 0 : index
    %c0_30 = arith.constant 0 : index
    %c0_31 = arith.constant 0 : index
    %48 = vector.load %arg11[%c0_29, %c0_30, %c0_31] : memref<1x8x32xf32, #tpu.memory_space<vmem>>, vector<1x8x32xf32>
    %49 = vector.shape_cast %48 : vector<1x8x32xf32> to vector<8x32xf32>
    %50 = vector.shape_cast %39 : vector<8x32xf32> to vector<1x8x32xf32>
    tpu.vector_store %arg11[%c0_29, %c0_30, %c0_31], %50 {strides = array<i32>} : memref<1x8x32xf32, #tpu.memory_space<vmem>>, vector<1x8x32xf32>,
    %c0_32 = arith.constant 0 : index
    %c0_33 = arith.constant 0 : index
    %c0_34 = arith.constant 0 : index
    %51 = vector.load %arg12[%c0_32, %c0_33, %c0_34] : memref<1x8x32xf32, #tpu.memory_space<vmem>>, vector<1x8x32xf32>
    %52 = vector.shape_cast %51 : vector<1x8x32xf32> to vector<8x32xf32>
    %53 = vector.shape_cast %45 : vector<8x32xf32> to vector<1x8x32xf32>
    tpu.vector_store %arg12[%c0_32, %c0_33, %c0_34], %53 {strides = array<i32>} : memref<1x8x32xf32, #tpu.memory_space<vmem>>, vector<1x8x32xf32>,
    return
  }
  func.func @transform_0(%arg0: i32, %arg1: i32) -> (i32, i32, i32) {
    %c0_i32 = arith.constant 0 : i32
    %c0_i32_0 = arith.constant 0 : i32
    return %arg1, %arg0, %c0_i32 : i32, i32, i32
  }
  func.func @transform_1(%arg0: i32, %arg1: i32) -> (i32, i32) {
    %c0_i32 = arith.constant 0 : i32
    %c0_i32_0 = arith.constant 0 : i32
    %c0_i32_1 = arith.constant 0 : i32
    return %c0_i32, %c0_i32_0 : i32, i32
  }
  func.func @transform_2(%arg0: i32, %arg1: i32) -> (i32, i32) {
    %c0_i32 = arith.constant 0 : i32
    %c0_i32_0 = arith.constant 0 : i32
    %c0_i32_1 = arith.constant 0 : i32
    return %c0_i32, %c0_i32_0 : i32, i32
  }
  func.func @transform_3(%arg0: i32, %arg1: i32) -> (i32, i32) {
    %c0_i32 = arith.constant 0 : i32
    %c0_i32_0 = arith.constant 0 : i32
    %c0_i32_1 = arith.constant 0 : i32
    return %c0_i32, %c0_i32_0 : i32, i32
  }
  func.func @transform_4(%arg0: i32, %arg1: i32) -> (i32, i32) {
    %c0_i32 = arith.constant 0 : i32
    %c0_i32_0 = arith.constant 0 : i32
    %c0_i32_1 = arith.constant 0 : i32
    return %c0_i32, %c0_i32_0 : i32, i32
  }
  func.func @transform_5(%arg0: i32, %arg1: i32) -> (i32, i32) {
    %c0_i32 = arith.constant 0 : i32
    %c0_i32_0 = arith.constant 0 : i32
    return %arg0, %c0_i32 : i32, i32
  }
  func.func @transform_6(%arg0: i32, %arg1: i32) -> (i32, i32) {
    %c0_i32 = arith.constant 0 : i32
    %c0_i32_0 = arith.constant 0 : i32
    return %arg0, %c0_i32 : i32, i32
  }
  func.func @transform_7(%arg0: i32, %arg1: i32) -> (i32, i32) {
    %c0_i32 = arith.constant 0 : i32
    %c0_i32_0 = arith.constant 0 : i32
    return %arg0, %c0_i32 : i32, i32
  }
  func.func @transform_8(%arg0: i32, %arg1: i32) -> (i32, i32) {
    %c0_i32 = arith.constant 0 : i32
    %c0_i32_0 = arith.constant 0 : i32
    return %arg0, %c0_i32 : i32, i32
  }
  func.func @transform_9(%arg0: i32, %arg1: i32) -> (i32, i32, i32) {
    %c0_i32 = arith.constant 0 : i32
    %c0_i32_0 = arith.constant 0 : i32
    return %arg1, %arg0, %c0_i32 : i32, i32, i32
  }
  func.func @transform_10(%arg0: i32, %arg1: i32) -> (i32, i32, i32) {
    %c0_i32 = arith.constant 0 : i32
    %c0_i32_0 = arith.constant 0 : i32
    return %arg1, %arg0, %c0_i32 : i32, i32, i32
  }
  func.func @transform_11(%arg0: i32, %arg1: i32) -> (i32, i32) {
    %c0_i32 = arith.constant 0 : i32
    %c0_i32_0 = arith.constant 0 : i32
    return %arg0, %c0_i32 : i32, i32
  }
}

</mosaic_0001>

<llo_original>
// kernel: dhsnn_forward_seq.1
$region0: #{dhsnn_forward_seq.1}
  #allocation0 [shape = 'u32[]', space=smem, size = 0x4, offset = 0x4, fixed_abs, tag = 'smem constant byte address 0x4 - core index']
  #allocation1 [shape = 'u32[144,128]{1,0:T(1,128)}', space=vmem, size = 0x12000, scoped, tag = 'internal scratch']
  #allocation2 [shape = 'f32[8,32]{1,0:T(8,128)}', space=vmem, size = 0x1000, scoped, tag = 'scratch operand']
  #allocation3 [shape = 'f32[8,32]{1,0:T(8,128)}', space=vmem, size = 0x1000, scoped, tag = 'scratch operand']
  %s0 = inlined_call_operand.vmem [shape: bf16[8,8,32], index: 0, kind: input, shape index: {}]
  %s1 = inlined_call_operand.vmem [shape: bf16[32,128], index: 1, kind: input, shape index: {}]
  %s2 = inlined_call_operand.vmem [shape: f32[1,128], index: 2, kind: input, shape index: {}]
  %s3 = inlined_call_operand.vmem [shape: f32[1,128], index: 3, kind: input, shape index: {}]
  %s4 = inlined_call_operand.vmem [shape: f32[1,32], index: 4, kind: input, shape index: {}]
  %s5 = inlined_call_operand.vmem [shape: f32[8,32], index: 5, kind: input, shape index: {}]
  %s6 = inlined_call_operand.vmem [shape: f32[8,32], index: 6, kind: input, shape index: {}]
  %s7 = inlined_call_operand.vmem [shape: f32[8,128], index: 7, kind: input, shape index: {}, may-alias: {7,11}]
  %s8 = inlined_call_operand.vmem [shape: f32[8,32], index: 8, kind: input, shape index: {}]
  %s9 = inlined_call_operand.vmem [shape: f32[8,8,32], index: 9, kind: output, shape index: {0}]
  %s10 = inlined_call_operand.vmem [shape: f32[8,8,32], index: 10, kind: output, shape index: {1}]
  %s11 = inlined_call_operand.vmem [shape: f32[8,128], index: 11, kind: output, shape index: {2}, may-alias: {7,11}]
  %12 = xla_tuple %s9, %s10, %s11
  %s13 = sld [smem:[#allocation0]]
  $region89: #{dhsnn_forward_seq.1} parent=0
    _
  %s15 = ssub.s32 1, %s13
  %s16 = scalar_select 0, %s15, %s13
  loop: start=0, step=1, limit=10
  $region2: #{dhsnn_forward_seq.1} parent=0 // loop_pre_header
    _
  $region3: #{dhsnn_forward_seq.1} parent=0 // loop_header
    %s18 = sphi 0, %s22
    %p19 = scmp.ge.s32.totalorder %s18, 10
    %s25 = sphi 0, %s37
    %s26 = sphi 0, %s33
    %s27 = sphi 0, %s25
    %s28 = sphi 0, %s26
    %s29 = sphi 0, %s27
    %s30 = sphi 0, %s28
    %s42 = sphi 0, %s44
    %s45 = sphi 0, %s42
    %s46 = sphi 0, %s45
    %s62 = sphi 0, %s46
    %s66 = sphi 0, %s66
    %s68 = sphi 0, %s66
    %s69 = sphi 0, %s68
    %s83 = sphi 0, %s69
    %s87 = sphi 0, %s87
    %s89 = sphi 0, %s87
    %s90 = sphi 0, %s89
    %s104 = sphi 0, %s90
    %s108 = sphi 0, %s108
    %s110 = sphi 0, %s108
    %s111 = sphi 0, %s110
    %s125 = sphi 0, %s111
    %s129 = sphi 0, %s129
    %s131 = sphi 0, %s129
    %s132 = sphi 0, %s131
    %s146 = sphi 0, %s132
    %s152 = sphi 0, %s154
    %s155 = sphi 0, %s152
    %s156 = sphi 0, %s155
    %s172 = sphi 0, %s156
    %s178 = sphi 0, %s180
    %s181 = sphi 0, %s178
    %s182 = sphi 0, %s181
    %s198 = sphi 0, %s182
    %s204 = sphi 0, %s206
    %s207 = sphi 0, %s204
    %s208 = sphi 0, %s207
    %s224 = sphi 0, %s208
    %s230 = sphi 0, %s232
    %s233 = sphi 0, %s230
    %s234 = sphi 0, %s233
    %s250 = sphi 0, %s234
    %s258 = sphi 0, %s260
    %s261 = sphi 0, %s258
    %s262 = sphi 0, %s261
    %s278 = sphi 0, %s262
    %s286 = sphi 0, %s288
    %s289 = sphi 0, %s286
    %s290 = sphi 0, %s289
    %s306 = sphi 0, %s290
    %s312 = sphi 0, %s314
    %s315 = sphi 0, %s312
    %s316 = sphi 0, %s315
    %s332 = sphi 0, %s316
  $region4: #{dhsnn_forward_seq.1} parent=0 // loop_header_branch
    %21 = sbr.rel (%p19) target = $region8
  $region5: #{dhsnn_forward_seq.1} parent=0 // loop_body
    %s23 = ssub.s32 %s18, 1
    %s24 = ssub.s32 %s18, 2
    %s31 = sadd.s32 1, %s26
    %p32 = scmp.ge.s32.totalorder %s31, 8
    %s33 = scalar_select %p32, 0, %s31
    %s34 = sadd.s32 1, %s25
    %s35 = scalar_select %p32, %s34, %s25
    %p36 = scmp.ge.s32.totalorder %s35, 1
    %s37 = scalar_select %p36, 0, %s35
    %s38 = ssub.s32 %s26, %s33
    %s39 = ssub.s32 %s25, %s37
    %s40 = sor.u32 %s38, %s39
    %p41 = scmp.eq.s32.totalorder %s40, 0
    %s43 = sadd.s32 %s42, 1
    %s44 = scalar_select %p41, %s42, %s43
    %p47 = pneg %p41
    %p48 = scmp.eq.s32.totalorder %s18, 7
    %p49 = por %p47, %p48
    %p50 = scmp.ne.s32.totalorder %s42, %s45
    %p51 = scmp.eq.s32.totalorder %s18, 0
    %p52 = por %p50, %p51
    %p53 = scmp.ne.s32.totalorder %s42, %s45
    %p54 = scmp.eq.s32.totalorder %s23, 7
    %p55 = por %p53, %p54
    %p56 = scmp.ne.s32.totalorder %s45, %s46
    %p57 = scmp.eq.s32.totalorder %s23, 0
    %p58 = por %p56, %p57
    %p59 = scmp.ne.s32.totalorder %s45, %s46
    %p60 = scmp.eq.s32.totalorder %s24, 7
    %p61 = por %p59, %p60
    %p63 = scmp.ne.s32.totalorder %s46, %s62
    %p64 = scmp.eq.s32.totalorder %s24, 0
    %p65 = por %p63, %p64
    %s67 = sadd.s32 %s66, 1
    %p70 = scmp.eq.s32.totalorder %s18, 7
    %p71 = scmp.ne.s32.totalorder %s66, %s68
    %p72 = scmp.eq.s32.totalorder %s18, 0
    %p73 = por %p71, %p72
    %p74 = scmp.ne.s32.totalorder %s66, %s68
    %p75 = scmp.eq.s32.totalorder %s23, 7
    %p76 = por %p74, %p75
    %p77 = scmp.ne.s32.totalorder %s68, %s69
    %p78 = scmp.eq.s32.totalorder %s23, 0
    %p79 = por %p77, %p78
    %p80 = scmp.ne.s32.totalorder %s68, %s69
    %p81 = scmp.eq.s32.totalorder %s24, 7
    %p82 = por %p80, %p81
    %p84 = scmp.ne.s32.totalorder %s69, %s83
    %p85 = scmp.eq.s32.totalorder %s24, 0
    %p86 = por %p84, %p85
    %s88 = sadd.s32 %s87, 1
    %p91 = scmp.eq.s32.totalorder %s18, 7
    %p92 = scmp.ne.s32.totalorder %s87, %s89
    %p93 = scmp.eq.s32.totalorder %s18, 0
    %p94 = por %p92, %p93
    %p95 = scmp.ne.s32.totalorder %s87, %s89
    %p96 = scmp.eq.s32.totalorder %s23, 7
    %p97 = por %p95, %p96
    %p98 = scmp.ne.s32.totalorder %s89, %s90
    %p99 = scmp.eq.s32.totalorder %s23, 0
    %p100 = por %p98, %p99
    %p101 = scmp.ne.s32.totalorder %s89, %s90
    %p102 = scmp.eq.s32.totalorder %s24, 7
    %p103 = por %p101, %p102
    %p105 = scmp.ne.s32.totalorder %s90, %s104
    %p106 = scmp.eq.s32.totalorder %s24, 0
    %p107 = por %p105, %p106
    %s109 = sadd.s32 %s108, 1
    %p112 = scmp.eq.s32.totalorder %s18, 7
    %p113 = scmp.ne.s32.totalorder %s108, %s110
    %p114 = scmp.eq.s32.totalorder %s18, 0
    %p115 = por %p113, %p114
    %p116 = scmp.ne.s32.totalorder %s108, %s110
    %p117 = scmp.eq.s32.totalorder %s23, 7
    %p118 = por %p116, %p117
    %p119 = scmp.ne.s32.totalorder %s110, %s111
    %p120 = scmp.eq.s32.totalorder %s23, 0
    %p121 = por %p119, %p120
    %p122 = scmp.ne.s32.totalorder %s110, %s111
    %p123 = scmp.eq.s32.totalorder %s24, 7
    %p124 = por %p122, %p123
    %p126 = scmp.ne.s32.totalorder %s111, %s125
    %p127 = scmp.eq.s32.totalorder %s24, 0
    %p128 = por %p126, %p127
    %s130 = sadd.s32 %s129, 1
    %p133 = scmp.eq.s32.totalorder %s18, 7
    %p134 = scmp.ne.s32.totalorder %s129, %s131
    %p135 = scmp.eq.s32.totalorder %s18, 0
    %p136 = por %p134, %p135
    %p137 = scmp.ne.s32.totalorder %s129, %s131
    %p138 = scmp.eq.s32.totalorder %s23, 7
    %p139 = por %p137, %p138
    %p140 = scmp.ne.s32.totalorder %s131, %s132
    %p141 = scmp.eq.s32.totalorder %s23, 0
    %p142 = por %p140, %p141
    %p143 = scmp.ne.s32.totalorder %s131, %s132
    %p144 = scmp.eq.s32.totalorder %s24, 7
    %p145 = por %p143, %p144
    %p147 = scmp.ne.s32.totalorder %s132, %s146
    %p148 = scmp.eq.s32.totalorder %s24, 0
    %p149 = por %p147, %p148
    %s150 = ssub.s32 %s25, %s37
    %p151 = scmp.eq.s32.totalorder %s150, 0
    %s153 = sadd.s32 %s152, 1
    %s154 = scalar_select %p151, %s152, %s153
    %p157 = pneg %p151
    %p158 = scmp.eq.s32.totalorder %s18, 7
    %p159 = por %p157, %p158
    %p160 = scmp.ne.s32.totalorder %s152, %s155
    %p161 = scmp.eq.s32.totalorder %s18, 0
    %p162 = por %p160, %p161
    %p163 = scmp.ne.s32.totalorder %s152, %s155
    %p164 = scmp.eq.s32.totalorder %s23, 7
    %p165 = por %p163, %p164
    %p166 = scmp.ne.s32.totalorder %s155, %s156
    %p167 = scmp.eq.s32.totalorder %s23, 0
    %p168 = por %p166, %p167
    %p169 = scmp.ne.s32.totalorder %s155, %s156
    %p170 = scmp.eq.s32.totalorder %s24, 7
    %p171 = por %p169, %p170
    %p173 = scmp.ne.s32.totalorder %s156, %s172
    %p174 = scmp.eq.s32.totalorder %s24, 0
    %p175 = por %p173, %p174
    %s176 = ssub.s32 %s25, %s37
    %p177 = scmp.eq.s32.totalorder %s176, 0
    %s179 = sadd.s32 %s178, 1
    %s180 = scalar_select %p177, %s178, %s179
    %p183 = pneg %p177
    %p184 = scmp.eq.s32.totalorder %s18, 7
    %p185 = por %p183, %p184
    %p186 = scmp.ne.s32.totalorder %s178, %s181
    %p187 = scmp.eq.s32.totalorder %s18, 0
    %p188 = por %p186, %p187
    %p189 = scmp.ne.s32.totalorder %s178, %s181
    %p190 = scmp.eq.s32.totalorder %s23, 7
    %p191 = por %p189, %p190
    %p192 = scmp.ne.s32.totalorder %s181, %s182
    %p193 = scmp.eq.s32.totalorder %s23, 0
    %p194 = por %p192, %p193
    %p195 = scmp.ne.s32.totalorder %s181, %s182
    %p196 = scmp.eq.s32.totalorder %s24, 7
    %p197 = por %p195, %p196
    %p199 = scmp.ne.s32.totalorder %s182, %s198
    %p200 = scmp.eq.s32.totalorder %s24, 0
    %p201 = por %p199, %p200
    %s202 = ssub.s32 %s25, %s37
    %p203 = scmp.eq.s32.totalorder %s202, 0
    %s205 = sadd.s32 %s204, 1
    %s206 = scalar_select %p203, %s204, %s205
    %p209 = pneg %p203
    %p210 = scmp.eq.s32.totalorder %s18, 7
    %p211 = por %p209, %p210
    %p212 = scmp.ne.s32.totalorder %s204, %s207
    %p213 = scmp.eq.s32.totalorder %s18, 0
    %p214 = por %p212, %p213
    %p215 = scmp.ne.s32.totalorder %s204, %s207
    %p216 = scmp.eq.s32.totalorder %s23, 7
    %p217 = por %p215, %p216
    %p218 = scmp.ne.s32.totalorder %s207, %s208
    %p219 = scmp.eq.s32.totalorder %s23, 0
    %p220 = por %p218, %p219
    %p221 = scmp.ne.s32.totalorder %s207, %s208
    %p222 = scmp.eq.s32.totalorder %s24, 7
    %p223 = por %p221, %p222
    %p225 = scmp.ne.s32.totalorder %s208, %s224
    %p226 = scmp.eq.s32.totalorder %s24, 0
    %p227 = por %p225, %p226
    %s228 = ssub.s32 %s25, %s37
    %p229 = scmp.eq.s32.totalorder %s228, 0
    %s231 = sadd.s32 %s230, 1
    %s232 = scalar_select %p229, %s230, %s231
    %p235 = pneg %p229
    %p236 = scmp.eq.s32.totalorder %s18, 7
    %p237 = por %p235, %p236
    %p238 = scmp.ne.s32.totalorder %s230, %s233
    %p239 = scmp.eq.s32.totalorder %s18, 0
    %p240 = por %p238, %p239
    %p241 = scmp.ne.s32.totalorder %s230, %s233
    %p242 = scmp.eq.s32.totalorder %s23, 7
    %p243 = por %p241, %p242
    %p244 = scmp.ne.s32.totalorder %s233, %s234
    %p245 = scmp.eq.s32.totalorder %s23, 0
    %p246 = por %p244, %p245
    %p247 = scmp.ne.s32.totalorder %s233, %s234
    %p248 = scmp.eq.s32.totalorder %s24, 7
    %p249 = por %p247, %p248
    %p251 = scmp.ne.s32.totalorder %s234, %s250
    %p252 = scmp.eq.s32.totalorder %s24, 0
    %p253 = por %p251, %p252
    %s254 = ssub.s32 %s26, %s33
    %s255 = ssub.s32 %s25, %s37
    %s256 = sor.u32 %s254, %s255
    %p257 = scmp.eq.s32.totalorder %s256, 0
    %s259 = sadd.s32 %s258, 1
    %s260 = scalar_select %p257, %s258, %s259
    %p263 = pneg %p257
    %p264 = scmp.eq.s32.totalorder %s18, 7
    %p265 = por %p263, %p264
    %p266 = scmp.ne.s32.totalorder %s258, %s261
    %p267 = scmp.eq.s32.totalorder %s18, 0
    %p268 = por %p266, %p267
    %p269 = scmp.ne.s32.totalorder %s258, %s261
    %p270 = scmp.eq.s32.totalorder %s23, 7
    %p271 = por %p269, %p270
    %p272 = scmp.ne.s32.totalorder %s261, %s262
    %p273 = scmp.eq.s32.totalorder %s23, 0
    %p274 = por %p272, %p273
    %p275 = scmp.ne.s32.totalorder %s261, %s262
    %p276 = scmp.eq.s32.totalorder %s24, 7
    %p277 = por %p275, %p276
    %p279 = scmp.ne.s32.totalorder %s262, %s278
    %p280 = scmp.eq.s32.totalorder %s24, 0
    %p281 = por %p279, %p280
    %s282 = ssub.s32 %s26, %s33
    %s283 = ssub.s32 %s25, %s37
    %s284 = sor.u32 %s282, %s283
    %p285 = scmp.eq.s32.totalorder %s284, 0
    %s287 = sadd.s32 %s286, 1
    %s288 = scalar_select %p285, %s286, %s287
    %p291 = pneg %p285
    %p292 = scmp.eq.s32.totalorder %s18, 7
    %p293 = por %p291, %p292
    %p294 = scmp.ne.s32.totalorder %s286, %s289
    %p295 = scmp.eq.s32.totalorder %s18, 0
    %p296 = por %p294, %p295
    %p297 = scmp.ne.s32.totalorder %s286, %s289
    %p298 = scmp.eq.s32.totalorder %s23, 7
    %p299 = por %p297, %p298
    %p300 = scmp.ne.s32.totalorder %s289, %s290
    %p301 = scmp.eq.s32.totalorder %s23, 0
    %p302 = por %p300, %p301
    %p303 = scmp.ne.s32.totalorder %s289, %s290
    %p304 = scmp.eq.s32.totalorder %s24, 7
    %p305 = por %p303, %p304
    %p307 = scmp.ne.s32.totalorder %s290, %s306
    %p308 = scmp.eq.s32.totalorder %s24, 0
    %p309 = por %p307, %p308
    %s310 = ssub.s32 %s25, %s37
    %p311 = scmp.eq.s32.totalorder %s310, 0
    %s313 = sadd.s32 %s312, 1
    %s314 = scalar_select %p311, %s312, %s313
    %p317 = pneg %p311
    %p318 = scmp.eq.s32.totalorder %s18, 7
    %p319 = por %p317, %p318
    %p320 = scmp.ne.s32.totalorder %s312, %s315
    %p321 = scmp.eq.s32.totalorder %s18, 0
    %p322 = por %p320, %p321
    %p323 = scmp.ne.s32.totalorder %s312, %s315
    %p324 = scmp.eq.s32.totalorder %s23, 7
    %p325 = por %p323, %p324
    %p326 = scmp.ne.s32.totalorder %s315, %s316
    %p327 = scmp.eq.s32.totalorder %s23, 0
    %p328 = por %p326, %p327
    %p329 = scmp.ne.s32.totalorder %s315, %s316
    %p330 = scmp.eq.s32.totalorder %s24, 7
    %p331 = por %p329, %p330
    %p333 = scmp.ne.s32.totalorder %s316, %s332
    %p334 = scmp.eq.s32.totalorder %s24, 0
    %p335 = por %p333, %p334
    %p336 = scmp.le.s32.totalorder 1, %s18
    %p337 = scmp.lt.s32.totalorder %s18, 9
    %p338 = pnand %p336, %p337
    %p339 = pneg %p338
    // Predicated region
    $region9: #{dhsnn_forward_seq.1} parent=5 // pred_check
      _
    $region10: #{dhsnn_forward_seq.1} parent=5 // pred_check_branch
      %341 = sbr.rel (%p338) target = $region12
    $region11: #{dhsnn_forward_seq.1} parent=5 // pred_region
      %s342 = ssub.s32 %s18, 1
      // Predicated region
      $region13: #{dhsnn_forward_seq.1} parent=11 // pred_check
        %p343 = pneg %p79
      $region14: #{dhsnn_forward_seq.1} parent=11 // pred_check_branch
        %345 = sbr.rel (%p343) target = $region16
      $region15: #{dhsnn_forward_seq.1} parent=11 // pred_region
        _
      $region16: #{dhsnn_forward_seq.1} parent=11 // pred_fallthru
        _
      // Predicated region
      $region17: #{dhsnn_forward_seq.1} parent=11 // pred_check
        %p346 = pneg %p100
      $region18: #{dhsnn_forward_seq.1} parent=11 // pred_check_branch
        %348 = sbr.rel (%p346) target = $region20
      $region19: #{dhsnn_forward_seq.1} parent=11 // pred_region
        _
      $region20: #{dhsnn_forward_seq.1} parent=11 // pred_fallthru
        _
      // Predicated region
      $region21: #{dhsnn_forward_seq.1} parent=11 // pred_check
        %p349 = pneg %p121
      $region22: #{dhsnn_forward_seq.1} parent=11 // pred_check_branch
        %351 = sbr.rel (%p349) target = $region24
      $region23: #{dhsnn_forward_seq.1} parent=11 // pred_region
        _
      $region24: #{dhsnn_forward_seq.1} parent=11 // pred_fallthru
        _
      // Predicated region
      $region25: #{dhsnn_forward_seq.1} parent=11 // pred_check
        %p352 = pneg %p142
      $region26: #{dhsnn_forward_seq.1} parent=11 // pred_check_branch
        %354 = sbr.rel (%p352) target = $region28
      $region27: #{dhsnn_forward_seq.1} parent=11 // pred_region
        _
      $region28: #{dhsnn_forward_seq.1} parent=11 // pred_fallthru
        _
      // Predicated region
      $region29: #{dhsnn_forward_seq.1} parent=11 // pred_check
        %p355 = pneg %p168
      $region30: #{dhsnn_forward_seq.1} parent=11 // pred_check_branch
        %357 = sbr.rel (%p355) target = $region32
      $region31: #{dhsnn_forward_seq.1} parent=11 // pred_region
        %p358 = scmp.lt.s32.totalorder %s27, 0
        %s359 = scalar_select %p358, %s27, 0
        %s360 = smul.addr %s359, 8
        %s361 = scalar_lea.vmem %s5, %s360
      $region32: #{dhsnn_forward_seq.1} parent=11 // pred_fallthru
        _
      // Predicated region
      $region33: #{dhsnn_forward_seq.1} parent=11 // pred_check
        %p362 = pneg %p194
      $region34: #{dhsnn_forward_seq.1} parent=11 // pred_check_branch
        %364 = sbr.rel (%p362) target = $region36
      $region35: #{dhsnn_forward_seq.1} parent=11 // pred_region
        %p365 = scmp.lt.s32.totalorder %s27, 0
        %s366 = scalar_select %p365, %s27, 0
        %s367 = smul.addr %s366, 8
        %s368 = scalar_lea.vmem %s6, %s367
      $region36: #{dhsnn_forward_seq.1} parent=11 // pred_fallthru
        _
      // Predicated region
      $region37: #{dhsnn_forward_seq.1} parent=11 // pred_check
        %p369 = pneg %p220
      $region38: #{dhsnn_forward_seq.1} parent=11 // pred_check_branch
        %371 = sbr.rel (%p369) target = $region40
      $region39: #{dhsnn_forward_seq.1} parent=11 // pred_region
        %p372 = scmp.lt.s32.totalorder %s27, 0
        %s373 = scalar_select %p372, %s27, 0
        %s374 = smul.addr %s373, 8
        %s375 = scalar_lea.vmem %s7, %s374
      $region40: #{dhsnn_forward_seq.1} parent=11 // pred_fallthru
        _
      // Predicated region
      $region41: #{dhsnn_forward_seq.1} parent=11 // pred_check
        %p376 = pneg %p246
      $region42: #{dhsnn_forward_seq.1} parent=11 // pred_check_branch
        %378 = sbr.rel (%p376) target = $region44
      $region43: #{dhsnn_forward_seq.1} parent=11 // pred_region
        %p379 = scmp.lt.s32.totalorder %s27, 0
        %s380 = scalar_select %p379, %s27, 0
        %s381 = smul.addr %s380, 8
        %s382 = scalar_lea.vmem %s8, %s381
      $region44: #{dhsnn_forward_seq.1} parent=11 // pred_fallthru
        _
    $region12: #{dhsnn_forward_seq.1} parent=5 // pred_fallthru
      _
    %p383 = scmp.lt.s32.totalorder %s18, 8
    // Predicated region
    $region45: #{dhsnn_forward_seq.1} parent=5 // pred_check
      %p384 = pneg %p383
    $region46: #{dhsnn_forward_seq.1} parent=5 // pred_check_branch
      %386 = sbr.rel (%p384) target = $region48
    $region47: #{dhsnn_forward_seq.1} parent=5 // pred_region
      // Predicated region
      $region49: #{dhsnn_forward_seq.1} parent=47 // pred_check
        %p387 = pneg %p52
      $region50: #{dhsnn_forward_seq.1} parent=47 // pred_check_branch
        %389 = sbr.rel (%p387) target = $region52
      $region51: #{dhsnn_forward_seq.1} parent=47 // pred_region
        %p390 = scmp.lt.s32.totalorder %s26, 7
        %s391 = scalar_select %p390, %s26, 7
        %p392 = scmp.lt.s32.totalorder %s25, 0
        %s393 = scalar_select %p392, %s25, 0
        %s394 = sadd.s32 %s393, %s391
        %s395 = smul.addr %s394, 4
        %s396 = scalar_lea.vmem %s0, %s395
      $region52: #{dhsnn_forward_seq.1} parent=47 // pred_fallthru
        _
    $region48: #{dhsnn_forward_seq.1} parent=5 // pred_fallthru
      _
    %p397 = scmp.le.s32.totalorder 1, %s18
    %p398 = scmp.lt.s32.totalorder %s18, 9
    %p399 = pnand %p397, %p398
    %p400 = pneg %p399
    // Predicated region
    $region53: #{dhsnn_forward_seq.1} parent=5 // pred_check
      _
    $region54: #{dhsnn_forward_seq.1} parent=5 // pred_check_branch
      %402 = sbr.rel (%p399) target = $region56
    $region55: #{dhsnn_forward_seq.1} parent=5 // pred_region
      %s403 = ssub.s32 %s18, 1
      %p404 = scmp.lt.s32.totalorder %s28, 7
      %s405 = scalar_select %p404, %s28, 7
      %p406 = scmp.lt.s32.totalorder %s27, 0
      %s407 = scalar_select %p406, %s27, 0
      %s408 = sadd.s32 %s407, %s405
      %s409 = smul.addr %s408, 4
      %s410 = scalar_lea.vmem %s0, %s409
      %p411 = pneg %p58
      %p412 = pneg %p55
      %p413 = pneg %p79
      %p414 = pneg %p76
      %p415 = pneg %p100
      %p416 = pneg %p97
      %p417 = pneg %p121
      %p418 = pneg %p118
      %p419 = pneg %p142
      %p420 = pneg %p139
      %p421 = scmp.lt.s32.totalorder %s27, 0
      %s422 = scalar_select %p421, %s27, 0
      %s423 = smul.addr %s422, 8
      %s424 = scalar_lea.vmem %s5, %s423
      %p425 = pneg %p168
      %p426 = pneg %p165
      %p427 = scmp.lt.s32.totalorder %s27, 0
      %s428 = scalar_select %p427, %s27, 0
      %s429 = smul.addr %s428, 8
      %s430 = scalar_lea.vmem %s6, %s429
      %p431 = pneg %p194
      %p432 = pneg %p191
      %p433 = scmp.lt.s32.totalorder %s27, 0
      %s434 = scalar_select %p433, %s27, 0
      %s435 = smul.addr %s434, 8
      %s436 = scalar_lea.vmem %s7, %s435
      %p437 = pneg %p220
      %p438 = pneg %p217
      %p439 = scmp.lt.s32.totalorder %s27, 0
      %s440 = scalar_select %p439, %s27, 0
      %s441 = smul.addr %s440, 8
      %s442 = scalar_lea.vmem %s8, %s441
      %p443 = pneg %p246
      %p444 = pneg %p243
      %p445 = pneg %p274
      %p446 = pneg %p271
      %p447 = scmp.lt.s32.totalorder %s28, 7
      %s448 = scalar_select %p447, %s28, 7
      %p449 = scmp.lt.s32.totalorder %s27, 0
      %s450 = scalar_select %p449, %s27, 0
      %s451 = sadd.s32 %s450, %s448
      %s452 = smul.addr %s451, 8
      %s453 = scalar_lea.vmem %s9, %s452
      %p454 = pneg %p302
      %p455 = pneg %p299
      %p456 = scmp.lt.s32.totalorder %s28, 7
      %s457 = scalar_select %p456, %s28, 7
      %p458 = scmp.lt.s32.totalorder %s27, 0
      %s459 = scalar_select %p458, %s27, 0
      %s460 = sadd.s32 %s459, %s457
      %s461 = smul.addr %s460, 8
      %s462 = scalar_lea.vmem %s10, %s461
      %p463 = pneg %p328
      %p464 = pneg %p325
      %p465 = scmp.lt.s32.totalorder %s27, 0
      %s466 = scalar_select %p465, %s27, 0
      %s467 = smul.addr %s466, 8
      %s468 = scalar_lea.vmem %s11, %s467
      %p469 = scmp.lt.s32.totalorder %s28, 7
      %s470 = scalar_select %p469, %s28, 7
      %p471 = scmp.lt.s32.totalorder %s27, 0
      %s472 = scalar_select %p471, %s27, 0
      %s473 = sadd.s32 %s472, %s470
      %s474 = smul.addr %s473, 4
      %s475 = scalar_lea.vmem %s0, %s474
      %p476 = scmp.lt.s32.totalorder %s27, 0
      %s477 = scalar_select %p476, %s27, 0
      %s478 = smul.addr %s477, 8
      %s479 = scalar_lea.vmem %s5, %s478
      %p480 = scmp.lt.s32.totalorder %s27, 0
      %s481 = scalar_select %p480, %s27, 0
      %s482 = smul.addr %s481, 8
      %s483 = scalar_lea.vmem %s6, %s482
      %p484 = scmp.lt.s32.totalorder %s27, 0
      %s485 = scalar_select %p484, %s27, 0
      %s486 = smul.addr %s485, 8
      %s487 = scalar_lea.vmem %s7, %s486
      %p488 = scmp.lt.s32.totalorder %s27, 0
      %s489 = scalar_select %p488, %s27, 0
      %s490 = smul.addr %s489, 8
      %s491 = scalar_lea.vmem %s8, %s490
      %p492 = scmp.lt.s32.totalorder %s28, 7
      %s493 = scalar_select %p492, %s28, 7
      %p494 = scmp.lt.s32.totalorder %s27, 0
      %s495 = scalar_select %p494, %s27, 0
      %s496 = sadd.s32 %s495, %s493
      %s497 = smul.addr %s496, 8
      %s498 = scalar_lea.vmem %s9, %s497
      %p499 = scmp.lt.s32.totalorder %s28, 7
      %s500 = scalar_select %p499, %s28, 7
      %p501 = scmp.lt.s32.totalorder %s27, 0
      %s502 = scalar_select %p501, %s27, 0
      %s503 = sadd.s32 %s502, %s500
      %s504 = smul.addr %s503, 8
      %s505 = scalar_lea.vmem %s10, %s504
      %p506 = scmp.lt.s32.totalorder %s27, 0
      %s507 = scalar_select %p506, %s27, 0
      %s508 = smul.addr %s507, 8
      %s509 = scalar_lea.vmem %s11, %s508
      %p511 = scmp.eq.s32.totalorder %s28, 0
      // Predicated region
      $region57: #{dhsnn_forward_seq.1} parent=55 // pred_check
        %p512 = pneg %p511
      $region58: #{dhsnn_forward_seq.1} parent=55 // pred_check_branch
        %514 = sbr.rel (%p512) target = $region60
      $region59: #{dhsnn_forward_seq.1} parent=55 // pred_region
        %v515 = vld [vmem:[%s479] sm:$0xff]
        %vm516 = vcmask 261120
        %517 = vst.msk [vmem:[#allocation2] sm:$0xff] %vm516, %v515
        %v518 = vld [vmem:[%s483] sm:$0xff]
        %519 = vst.msk [vmem:[#allocation3] sm:$0xff] %vm516, %v518
        %v520 = vld [vmem:[%s487] sm:$0xff]
        %521 = vst [vmem:[%s509] sm:$0xff] %v520
      $region60: #{dhsnn_forward_seq.1} parent=55 // pred_fallthru
        _
      %v522 = vld [vmem:[%s475] sm:$0xf]
      %v523 = vld [vmem:[%s1] sm:$0xf]
      %v524 = vld [vmem:[%s1 + $0x4] sm:$0xf]
      %v525 = vld [vmem:[%s1 + $0x8] sm:$0xf]
      %v526 = vld [vmem:[%s1 + $0xc] sm:$0xf]
      %v527 = vld [vmem:[%s2] sm:$0x1]
      %v529 = vlaneseq
      %v530 = vshrl.u32 %v529, 7
      %v531 = vsub.s32 0, %v530
      %v532 = vrot.slane %v527, %v531
      %v538 = vunpack.c.l.b16 %v523
      %v539 = vunpack.c.l.b16 %v524
      %v540 = vunpack.c.l.b16 %v525
      %v541 = vunpack.c.l.b16 %v526
      %v542 = vpack.c.b16 %v539, %v538
      %v543 = vpack.c.b16 %v541, %v540
      %vm546 = vcmask 261120
      %v548 = vsel %vm546, %v522, 0
      %550 = vmatprep.subr.bf16.mxu0 0
      %551 = vmatpush1.bf16.msra.mxu0 0
      %552 = vmatprep.subr.bf16.mxu0 0
      %553 = vmatpush1.bf16.msra.mxu0 0
      %554 = vmatprep.subr.bf16.mxu0 0
      %555 = vmatpush1.bf16.msra.mxu0 0
      %556 = vmatprep.subr.bf16.mxu0 0
      %557 = vmatpush1.bf16.msra.mxu0 0
      %558 = vmatprep.subr.bf16.mxu0 0
      %559 = vmatpush1.bf16.msra.mxu0 0
      %560 = vmatprep.subr.bf16.mxu0 0
      %561 = vmatpush1.bf16.msra.mxu0 0
      %562 = vmatprep.subr.bf16.mxu0 0
      %563 = vmatpush1.bf16.msra.mxu0 %v543
      %564 = vmatprep.subr.bf16.mxu0 0
      %565 = vmatpush1.bf16.msra.mxu0 %v542
      %566 = vmatprep.subr.bf16.mxu0 0
      %567 = vmatpush2.bf16.msra.mxu0 0
      %568 = vmatprep.subr.bf16.mxu0 0
      %569 = vmatpush2.bf16.msra.mxu0 0
      %570 = vmatprep.subr.bf16.mxu0 0
      %571 = vmatpush2.bf16.msra.mxu0 0
      %572 = vmatprep.subr.bf16.mxu0 0
      %573 = vmatpush2.bf16.msra.mxu0 0
      %574 = vmatprep.subr.bf16.mxu0 0
      %575 = vmatpush2.bf16.msra.mxu0 0
      %576 = vmatprep.subr.bf16.mxu0 0
      %577 = vmatpush2.bf16.msra.mxu0 0
      %578 = vmatprep.subr.bf16.mxu0 0
      %579 = vmatpush2.bf16.msra.mxu0 0
      %580 = vmatprep.subr.bf16.mxu0 0
      %581 = vmatpush2.bf16.msra.mxu0 0
      %582 = vmatprep.mubr.bf16.mxu0 0
      %583 = vmatmul.mubr.bf16.gmra.mxu0 %v548
      %v584 = vpop.f32.mrf.mxu0
      %v585 = vadd.f32 %v532, %v584
      %v586 = vpop.f32.mrf.mxu0
      %v587 = vpop.f32.mrf.mxu0
      %v588 = vpop.f32.mrf.mxu0
      %589 = vdwg.mxu0
      %v590 = vld [vmem:[%s3] sm:$0x1]
      %v591 = vld [vmem:[%s509] sm:$0xff]
      %v593 = vlaneseq
      %v594 = vshrl.u32 %v593, 7
      %v595 = vsub.s32 0, %v594
      %v596 = vrot.slane %v590, %v595
      %v598 = vmul.f32 %v596, %v591
      %v599 = vsub.f32 1.0, %v590
      %v601 = vlaneseq
      %v602 = vshrl.u32 %v601, 7
      %v603 = vsub.s32 0, %v602
      %v604 = vrot.slane %v599, %v603
      %v606 = vmul.f32 %v604, %v585
      %v607 = vadd.f32 %v598, %v606
      %608 = vst [vmem:[%s509] sm:$0xff] %v607
      %610 = vrot.lane.b32.xlu0 %v607, 96
      %v611 = vpop.permute.xlu0 %610
      %v613 = vadd.f32 %v607, %v611
      %614 = vrot.lane.b32.xlu0 %v607, 64
      %v615 = vpop.permute.xlu0 %614
      %v617 = vadd.f32 %v613, %v615
      %618 = vrot.lane.b32.xlu0 %v607, 32
      %v619 = vpop.permute.xlu0 %618
      %v621 = vadd.f32 %v617, %v619
      %v622 = vld [vmem:[%s4] sm:$0x1]
      %v623 = vld [vmem:[#allocation2] sm:$0xff]
      %v625 = vlaneseq
      %v626 = vshrl.u32 %v625, 7
      %v627 = vsub.s32 0, %v626
      %v628 = vrot.slane %v622, %v627
      %v630 = vmul.f32 %v623, %v628
      %v631 = vld [vmem:[#allocation3] sm:$0xff]
      %v632 = vsub.f32 1.0, %v631
      %v633 = vmul.f32 %v630, %v632
      %v634 = vsub.f32 1.0, %v622
      %v636 = vlaneseq
      %v637 = vshrl.u32 %v636, 7
      %v638 = vsub.s32 0, %v637
      %v639 = vrot.slane %v634, %v638
      %v641 = vmul.f32 %v639, %v621
      %v642 = vadd.f32 %v633, %v641
      %v643 = vld [vmem:[%s491] sm:$0xff]
      %v644 = vsub.f32 %v642, %v643
      %vm645 = vcmp.gt.f32.partialorder %v644, 0.0
      %v646 = vsel %vm645, 1, 0
      %v647 = vcvt.s32.f32 %v646
      %648 = vst.msk [vmem:[#allocation2] sm:$0xff] %vm546, %v642
      %649 = vst.msk [vmem:[#allocation3] sm:$0xff] %vm546, %v647
      %650 = vst.msk [vmem:[%s498] sm:$0xff] %vm546, %v642
      %651 = vst.msk [vmem:[%s505] sm:$0xff] %vm546, %v647
      %p652 = scmp.lt.s32.totalorder %s28, 7
      %s653 = scalar_select %p652, %s28, 7
      %p654 = scmp.lt.s32.totalorder %s27, 0
      %s655 = scalar_select %p654, %s27, 0
      %s656 = sadd.s32 %s655, %s653
      %s657 = smul.addr %s656, 8
      %s658 = scalar_lea.vmem %s9, %s657
      %p659 = scmp.lt.s32.totalorder %s28, 7
      %s660 = scalar_select %p659, %s28, 7
      %p661 = scmp.lt.s32.totalorder %s27, 0
      %s662 = scalar_select %p661, %s27, 0
      %s663 = sadd.s32 %s662, %s660
      %s664 = smul.addr %s663, 8
      %s665 = scalar_lea.vmem %s10, %s664
      %p666 = scmp.lt.s32.totalorder %s27, 0
      %s667 = scalar_select %p666, %s27, 0
      %s668 = smul.addr %s667, 8
      %s669 = scalar_lea.vmem %s11, %s668
      // Predicated region
      $region61: #{dhsnn_forward_seq.1} parent=55 // pred_check
        %p670 = pneg %p271
      $region62: #{dhsnn_forward_seq.1} parent=55 // pred_check_branch
        %672 = sbr.rel (%p670) target = $region64
      $region63: #{dhsnn_forward_seq.1} parent=55 // pred_region
        _
      $region64: #{dhsnn_forward_seq.1} parent=55 // pred_fallthru
        _
      // Predicated region
      $region65: #{dhsnn_forward_seq.1} parent=55 // pred_check
        %p673 = pneg %p299
      $region66: #{dhsnn_forward_seq.1} parent=55 // pred_check_branch
        %675 = sbr.rel (%p673) target = $region68
      $region67: #{dhsnn_forward_seq.1} parent=55 // pred_region
        _
      $region68: #{dhsnn_forward_seq.1} parent=55 // pred_fallthru
        _
      // Predicated region
      $region69: #{dhsnn_forward_seq.1} parent=55 // pred_check
        %p676 = pneg %p325
      $region70: #{dhsnn_forward_seq.1} parent=55 // pred_check_branch
        %678 = sbr.rel (%p676) target = $region72
      $region71: #{dhsnn_forward_seq.1} parent=55 // pred_region
        _
      $region72: #{dhsnn_forward_seq.1} parent=55 // pred_fallthru
        _
      // Predicated region
      $region73: #{dhsnn_forward_seq.1} parent=55 // pred_check
        %p679 = pneg %p325
      $region74: #{dhsnn_forward_seq.1} parent=55 // pred_check_branch
        %681 = sbr.rel (%p679) target = $region76
      $region75: #{dhsnn_forward_seq.1} parent=55 // pred_region
        %p682 = scmp.lt.s32.totalorder %s27, 0
        %s683 = scalar_select %p682, %s27, 0
        %s684 = smul.addr %s683, 8
        %s685 = scalar_lea.vmem %s11, %s684
      $region76: #{dhsnn_forward_seq.1} parent=55 // pred_fallthru
        _
    $region56: #{dhsnn_forward_seq.1} parent=5 // pred_fallthru
      _
    %p686 = scmp.le.s32.totalorder 2, %s18
    // Predicated region
    $region77: #{dhsnn_forward_seq.1} parent=5 // pred_check
      %p687 = pneg %p686
    $region78: #{dhsnn_forward_seq.1} parent=5 // pred_check_branch
      %689 = sbr.rel (%p687) target = $region80
    $region79: #{dhsnn_forward_seq.1} parent=5 // pred_region
      %s690 = ssub.s32 %s18, 2
      // Predicated region
      $region81: #{dhsnn_forward_seq.1} parent=79 // pred_check
        %p691 = pneg %p277
      $region82: #{dhsnn_forward_seq.1} parent=79 // pred_check_branch
        %693 = sbr.rel (%p691) target = $region84
      $region83: #{dhsnn_forward_seq.1} parent=79 // pred_region
        %p694 = scmp.lt.s32.totalorder %s30, 7
        %s695 = scalar_select %p694, %s30, 7
        %p696 = scmp.lt.s32.totalorder %s29, 0
        %s697 = scalar_select %p696, %s29, 0
        %s698 = sadd.s32 %s697, %s695
        %s699 = smul.addr %s698, 8
        %s700 = scalar_lea.vmem %s9, %s699
      $region84: #{dhsnn_forward_seq.1} parent=79 // pred_fallthru
        _
      // Predicated region
      $region85: #{dhsnn_forward_seq.1} parent=79 // pred_check
        %p701 = pneg %p305
      $region86: #{dhsnn_forward_seq.1} parent=79 // pred_check_branch
        %703 = sbr.rel (%p701) target = $region88
      $region87: #{dhsnn_forward_seq.1} parent=79 // pred_region
        %p704 = scmp.lt.s32.totalorder %s30, 7
        %s705 = scalar_select %p704, %s30, 7
        %p706 = scmp.lt.s32.totalorder %s29, 0
        %s707 = scalar_select %p706, %s29, 0
        %s708 = sadd.s32 %s707, %s705
        %s709 = smul.addr %s708, 8
        %s710 = scalar_lea.vmem %s10, %s709
      $region88: #{dhsnn_forward_seq.1} parent=79 // pred_fallthru
        _
    $region80: #{dhsnn_forward_seq.1} parent=5 // pred_fallthru
      _
  $region6: #{dhsnn_forward_seq.1} parent=0 // loop_footer
    %s22 = sadd.s32 1, %s18
  $region7: #{dhsnn_forward_seq.1} parent=0 // loop_footer_branch
    %17 = sbr.rel target = $region3
  $region8: #{dhsnn_forward_seq.1} parent=0 // loop_exit
    _

</llo_original>
